<compile_context>
chip_gen: v7x
topology: tpu7x:2x2x1
jax: 0.10.0
libtpu: 0.0.40
codegen_flags: <defaults>
</compile_context>

<pallas_src>
import jax
import jax.numpy as jnp
from jax.experimental import pallas as pl
from jax.experimental.pallas import tpu as pltpu


def _make_conv1x1_kernel(c_in, c_out, c_chunk):
    """Kernel over one (1, C_in, TILE_HW) pixel tile: channel reduction on the VPU/XLU."""

    def kernel(x_ref, w_ref, o_ref):
        # x_ref: (1, C_in, TILE_HW)   activations, spatial on lanes (lane-dense)
        # w_ref: (C_in, C_out)        full weight, resident in VMEM
        # o_ref: (1, C_out, TILE_HW)  output, spatial on lanes (lane-dense)
        rows = []
        for co in range(c_out):
            acc = None
            # Chunk the channel reduction so the (chunk, TILE_HW) temporary stays
            # small (bounded vreg pressure) even for large C_in.
            for c0 in range(0, c_in, c_chunk):
                c1 = min(c0 + c_chunk, c_in)
                xs = x_ref[0, c0:c1, :]               # (chunk, TILE_HW)
                ws = w_ref[c0:c1, co:co + 1]          # (chunk, 1) -> lane broadcast
                part = jnp.sum(xs * ws, axis=0, keepdims=True)  # (1, TILE_HW) f32
                acc = part if acc is None else acc + part
            rows.append(acc)
        res = rows[0] if c_out == 1 else jnp.concatenate(rows, axis=0)
        o_ref[0] = res.astype(o_ref.dtype)

    return kernel


def conv1x1_pallas(x_nchw, weight_oi):
    """1x1 conv, no bias.

    x_nchw:    (N, C_in, H, W) float32
    weight_oi: (C_out, C_in)   float32  (squeezed Conv2d weight (C_out, C_in, 1, 1))
    returns:   (N, C_out, H, W) float32
    """
    N, C_in, H, W = x_nchw.shape
    C_out = weight_oi.shape[0]
    HW = H * W

    # Pure reshapes / tiny transposes only -- no extra HBM pass over activations.
    x_flat = x_nchw.reshape(N, C_in, HW)           # (N, C_in, HW), no data movement
    w = jnp.transpose(weight_oi, (1, 0))           # (C_in, C_out), tiny

    # Per-generation tile sizing: v7x has 64 MiB physical VMEM, v5e/v6e 128 MiB.
    try:
        vmem_cap = int(getattr(pltpu.get_tpu_info(), "vmem_capacity_bytes"))
    except Exception:
        vmem_cap = 64 * 1024 * 1024
    budget = max(vmem_cap // 4, 4 * 1024 * 1024)   # headroom for scratch / spills
    bytes_per_lane_col = 4 * 2 * (C_in + C_out)    # f32, double-buffered in + out
    cap = budget // bytes_per_lane_col
    cap = max(128, min(8192, (cap // 128) * 128))  # multiple of 128 lanes

    if HW <= cap:
        tile_hw = HW                               # full spatial extent -> no padding
        hw_pad = HW
    else:
        tile_hw = cap
        hw_pad = pl.cdiv(HW, tile_hw) * tile_hw
        if hw_pad != HW:
            # Rare ragged tail (typical LPIPS spatial sizes divide evenly).
            x_flat = jnp.pad(x_flat, ((0, 0), (0, 0), (0, hw_pad - HW)))

    grid = (N, hw_pad // tile_hw)

    out_flat = pl.pallas_call(
        _make_conv1x1_kernel(C_in, C_out, min(C_in, 64)),
        out_shape=jax.ShapeDtypeStruct((N, C_out, hw_pad), x_nchw.dtype),
        grid_spec=pltpu.PrefetchScalarGridSpec(
            num_scalar_prefetch=0,
            grid=grid,
            in_specs=[
                # (1, C_in, TILE_HW): channel dim is the full array dim, spatial on lanes.
                pl.BlockSpec((1, C_in, tile_hw), lambda n, j: (n, 0, j)),
                # Full weight, resident every grid step (constant index -> no re-DMA).
                pl.BlockSpec((C_in, C_out), lambda n, j: (0, 0)),
            ],
            out_specs=pl.BlockSpec((1, C_out, tile_hw), lambda n, j: (n, 0, j)),
        ),
        compiler_params=pltpu.CompilerParams(
            dimension_semantics=("parallel", "parallel"),
            vmem_limit_bytes=int(min(vmem_cap, 128 * 1024 * 1024) * 3 // 4),
        ),
    )(x_flat, w)

    out = out_flat[:, :, :HW].reshape(N, C_out, H, W)
    return out


if __name__ == "__main__":
    # Deterministic synthetic params / inputs (LPIPS' learned linear head; no
    # checkpoint is loaded -- weights are random but deterministic).
    key = jax.random.PRNGKey(0)
    k_x, k_w = jax.random.split(key)

    N, C_in, H, W = 2, 4, 16, 16
    C_out = 1

    x = jax.random.normal(k_x, (N, C_in, H, W), dtype=jnp.float32)
    # Conv2d weight shape is (C_out, C_in, 1, 1); squeeze the 1x1 kernel dims.
    weight = jax.random.normal(k_w, (C_out, C_in), dtype=jnp.float32) * 0.1

    # TODO(synk): nn.Dropout(0.5) is identity in eval mode; training-mode dropout
    # (random mask + 2x scale) is not implemented here.

    out = conv1x1_pallas(x, weight)
    out = jax.block_until_ready(out)

    # Reference check against plain-JAX 1x1 conv.
    ref = jnp.einsum("nchw,oc->nohw", x, weight)
    assert out.shape == (N, C_out, H, W), out.shape
    assert jnp.allclose(out, ref, atol=1e-5, rtol=1e-5), float(
        jnp.max(jnp.abs(out - ref))
    )

    print("KERNEL_OK")
</pallas_src>

<mosaic_0001>
module attributes {stable_mosaic.version = 11 : i64} {
  func.func @kernel(%arg0: i32, %arg1: i32, %arg2: memref<1x4x256xf32, #tpu.memory_space<vmem>>, %arg3: memref<4x1xf32, #tpu.memory_space<vmem>>, %arg4: memref<1x1x256xf32, #tpu.memory_space<vmem>>) attributes {dimension_semantics = [#tpu.dimension_semantics<parallel>, #tpu.dimension_semantics<parallel>], iteration_bounds = array<i64: 2, 1>, scalar_prefetch = 0 : i64, scratch_operands = 0 : i64, tpu.core_type = #tpu.core_type<tc>, window_params = [{transform_indices = @transform_0, window_bounds = array<i64: 1, 4, 256>}, {pipeline_mode = #tpu.pipeline_mode<synchronous>, transform_indices = @transform_1, window_bounds = array<i64: 4, 1>}, {transform_indices = @transform_2, window_bounds = array<i64: 1, 1, 256>}]} {
    %c0 = arith.constant 0 : index
    %c0_0 = arith.constant 0 : index
    %c0_1 = arith.constant 0 : index
    %0 = vector.load %arg2[%c0, %c0_0, %c0_1] : memref<1x4x256xf32, #tpu.memory_space<vmem>>, vector<1x4x256xf32>
    %1 = vector.shape_cast %0 : vector<1x4x256xf32> to vector<4x256xf32>
    %c0_2 = arith.constant 0 : index
    %c0_3 = arith.constant 0 : index
    %2 = vector.load %arg3[%c0_2, %c0_3] : memref<4x1xf32, #tpu.memory_space<vmem>>, vector<4x1xf32>
    %3 = vector.broadcast %2 : vector<4x1xf32> to vector<4x256xf32>
    %4 = arith.mulf %1, %3 : vector<4x256xf32>
    %cst = arith.constant dense<0.000000e+00> : vector<256xf32>
    %5 = vector.multi_reduction <add>, %4, %cst [0] : vector<4x256xf32> to vector<256xf32>
    %6 = vector.shape_cast %5 : vector<256xf32> to vector<1x256xf32>
    %c0_4 = arith.constant 0 : index
    %c0_5 = arith.constant 0 : index
    %c0_6 = arith.constant 0 : index
    %7 = vector.load %arg4[%c0_4, %c0_5, %c0_6] : memref<1x1x256xf32, #tpu.memory_space<vmem>>, vector<1x1x256xf32>
    %8 = vector.shape_cast %7 : vector<1x1x256xf32> to vector<1x256xf32>
    %9 = vector.shape_cast %6 : vector<1x256xf32> to vector<1x1x256xf32>
    tpu.vector_store %arg4[%c0_4, %c0_5, %c0_6], %9 {strides = array<i32>} : memref<1x1x256xf32, #tpu.memory_space<vmem>>, vector<1x1x256xf32>,
    return
  }
  func.func @transform_0(%arg0: i32, %arg1: i32) -> (i32, i32, i32) {
    %c0_i32 = arith.constant 0 : i32
    %c0_i32_0 = arith.constant 0 : i32
    return %arg0, %c0_i32, %arg1 : i32, i32, i32
  }
  func.func @transform_1(%arg0: i32, %arg1: i32) -> (i32, i32) {
    %c0_i32 = arith.constant 0 : i32
    %c0_i32_0 = arith.constant 0 : i32
    %c0_i32_1 = arith.constant 0 : i32
    return %c0_i32, %c0_i32_0 : i32, i32
  }
  func.func @transform_2(%arg0: i32, %arg1: i32) -> (i32, i32, i32) {
    %c0_i32 = arith.constant 0 : i32
    %c0_i32_0 = arith.constant 0 : i32
    return %arg0, %c0_i32, %arg1 : i32, i32, i32
  }
}

</mosaic_0001>

<llo_original>
// kernel: tpu_custom_call.1
$region0: #{tpu_custom_call.1}
  #allocation0 [shape = 'u32[]', space=smem, size = 0x4, offset = 0x4, fixed_abs, tag = 'smem constant byte address 0x4 - core index']
  #allocation1 [shape = 'u32[144,128]{1,0:T(1,128)}', space=vmem, size = 0x12000, scoped, tag = 'internal scratch']
  %s0 = inlined_call_operand.hbm [shape: f32[2,4,256], index: 0, kind: input, shape index: {}]
  %s1 = inlined_call_operand.vmem [shape: f32[4,1], index: 1, kind: input, shape index: {}]
  %s2 = inlined_call_operand.hbm [shape: f32[2,1,256], index: 2, kind: output, shape index: {}]
  %s3 = sld [smem:[#allocation0]]
  $region45: #{tpu_custom_call.1} parent=0
    _
  %s5 = ssub.s32 1, %s3
  %s6 = scalar_select 0, %s5, %s3
  $region1: #{tpu_custom_call.1} parent=0
    #allocation2 [shape = 'u8[8192]{0}', space=vmem, size = 0x2000, scoped, tag = 'input window, operand 0']
    #allocation3 [shape = 's32[2]{0}', space=sflag, size = 0x8, scoped, tag = 'scoped memory for tpu_custom_call.1']
    #allocation4 [shape = 's32[2]{0}', space=sflag, size = 0x8, scoped, tag = 'scoped memory for tpu_custom_call.1']
    #allocation5 [shape = 'u8[2048]{0}', space=vmem, size = 0x800, scoped, tag = 'output window, operand 0']
    %7 = vsyncpa [#allocation3], 0
    %s8 = scalar_lea.sflag [#allocation3], 1
    %9 = vsyncpa %s8, 0
    %10 = vsyncpa [#allocation4], 0
    %s11 = scalar_lea.sflag [#allocation4], 1
    %12 = vsyncpa %s11, 0
    loop: start=0, step=1, limit=4
    $region2: #{tpu_custom_call.1} parent=1 // loop_pre_header
      _
    $region3: #{tpu_custom_call.1} parent=1 // loop_header
      %s14 = sphi 0, %s18
      %p15 = scmp.ge.s32.totalorder %s14, 4
      %s21 = sphi 0, %s33
      %s22 = sphi 0, %s29
      %s23 = sphi 0, %s21
      %s24 = sphi 0, %s22
      %s25 = sphi 0, %s23
      %s26 = sphi 0, %s24
      %s38 = sphi 0, %s40
      %s41 = sphi 0, %s38
      %s42 = sphi 0, %s41
      %s58 = sphi 0, %s42
      %s62 = sphi 0, %s62
      %s64 = sphi 0, %s62
      %s65 = sphi 0, %s64
      %s79 = sphi 0, %s65
      %s87 = sphi 0, %s89
      %s90 = sphi 0, %s87
      %s91 = sphi 0, %s90
      %s107 = sphi 0, %s91
    $region4: #{tpu_custom_call.1} parent=1 // loop_header_branch
      %17 = sbr.rel (%p15) target = $region8
    $region5: #{tpu_custom_call.1} parent=1 // loop_body
      %s19 = ssub.s32 %s14, 1
      %s20 = ssub.s32 %s14, 2
      %s27 = sadd.s32 1, %s22
      %p28 = scmp.ge.s32.totalorder %s27, 1
      %s29 = scalar_select %p28, 0, %s27
      %s30 = sadd.s32 1, %s21
      %s31 = scalar_select %p28, %s30, %s21
      %p32 = scmp.ge.s32.totalorder %s31, 2
      %s33 = scalar_select %p32, 0, %s31
      %s34 = ssub.s32 %s21, %s33
      %s35 = ssub.s32 %s22, %s29
      %s36 = sor.u32 %s34, %s35
      %p37 = scmp.eq.s32.totalorder %s36, 0
      %s39 = sadd.s32 %s38, 1
      %s40 = scalar_select %p37, %s38, %s39
      %p43 = pneg %p37
      %p44 = scmp.eq.s32.totalorder %s14, 1
      %p45 = por %p43, %p44
      %p46 = scmp.ne.s32.totalorder %s38, %s41
      %p47 = scmp.eq.s32.totalorder %s14, 0
      %p48 = por %p46, %p47
      %p49 = scmp.ne.s32.totalorder %s38, %s41
      %p50 = scmp.eq.s32.totalorder %s19, 1
      %p51 = por %p49, %p50
      %p52 = scmp.ne.s32.totalorder %s41, %s42
      %p53 = scmp.eq.s32.totalorder %s19, 0
      %p54 = por %p52, %p53
      %p55 = scmp.ne.s32.totalorder %s41, %s42
      %p56 = scmp.eq.s32.totalorder %s20, 1
      %p57 = por %p55, %p56
      %p59 = scmp.ne.s32.totalorder %s42, %s58
      %p60 = scmp.eq.s32.totalorder %s20, 0
      %p61 = por %p59, %p60
      %s63 = sadd.s32 %s62, 1
      %p66 = scmp.eq.s32.totalorder %s14, 1
      %p67 = scmp.ne.s32.totalorder %s62, %s64
      %p68 = scmp.eq.s32.totalorder %s14, 0
      %p69 = por %p67, %p68
      %p70 = scmp.ne.s32.totalorder %s62, %s64
      %p71 = scmp.eq.s32.totalorder %s19, 1
      %p72 = por %p70, %p71
      %p73 = scmp.ne.s32.totalorder %s64, %s65
      %p74 = scmp.eq.s32.totalorder %s19, 0
      %p75 = por %p73, %p74
      %p76 = scmp.ne.s32.totalorder %s64, %s65
      %p77 = scmp.eq.s32.totalorder %s20, 1
      %p78 = por %p76, %p77
      %p80 = scmp.ne.s32.totalorder %s65, %s79
      %p81 = scmp.eq.s32.totalorder %s20, 0
      %p82 = por %p80, %p81
      %s83 = ssub.s32 %s21, %s33
      %s84 = ssub.s32 %s22, %s29
      %s85 = sor.u32 %s83, %s84
      %p86 = scmp.eq.s32.totalorder %s85, 0
      %s88 = sadd.s32 %s87, 1
      %s89 = scalar_select %p86, %s87, %s88
      %p92 = pneg %p86
      %p93 = scmp.eq.s32.totalorder %s14, 1
      %p94 = por %p92, %p93
      %p95 = scmp.ne.s32.totalorder %s87, %s90
      %p96 = scmp.eq.s32.totalorder %s14, 0
      %p97 = por %p95, %p96
      %p98 = scmp.ne.s32.totalorder %s87, %s90
      %p99 = scmp.eq.s32.totalorder %s19, 1
      %p100 = por %p98, %p99
      %p101 = scmp.ne.s32.totalorder %s90, %s91
      %p102 = scmp.eq.s32.totalorder %s19, 0
      %p103 = por %p101, %p102
      %p104 = scmp.ne.s32.totalorder %s90, %s91
      %p105 = scmp.eq.s32.totalorder %s20, 1
      %p106 = por %p104, %p105
      %p108 = scmp.ne.s32.totalorder %s91, %s107
      %p109 = scmp.eq.s32.totalorder %s20, 0
      %p110 = por %p108, %p109
      %p111 = scmp.le.s32.totalorder 1, %s14
      %p112 = scmp.lt.s32.totalorder %s14, 3
      %p113 = pnand %p111, %p112
      %p114 = pneg %p113
      // Predicated region
      $region9: #{tpu_custom_call.1} parent=5 // pred_check
        _
      $region10: #{tpu_custom_call.1} parent=5 // pred_check_branch
        %116 = sbr.rel (%p113) target = $region12
      $region11: #{tpu_custom_call.1} parent=5 // pred_region
        %s117 = ssub.s32 %s14, 1
        // Predicated region
        $region13: #{tpu_custom_call.1} parent=11 // pred_check
          %p118 = pneg %p75
        $region14: #{tpu_custom_call.1} parent=11 // pred_check_branch
          %120 = sbr.rel (%p118) target = $region16
        $region15: #{tpu_custom_call.1} parent=11 // pred_region
          _
        $region16: #{tpu_custom_call.1} parent=11 // pred_fallthru
          _
      $region12: #{tpu_custom_call.1} parent=5 // pred_fallthru
        _
      %p121 = scmp.lt.s32.totalorder %s14, 2
      // Predicated region
      $region17: #{tpu_custom_call.1} parent=5 // pred_check
        %p122 = pneg %p121
      $region18: #{tpu_custom_call.1} parent=5 // pred_check_branch
        %124 = sbr.rel (%p122) target = $region20
      $region19: #{tpu_custom_call.1} parent=5 // pred_region
        // Predicated region
        $region21: #{tpu_custom_call.1} parent=19 // pred_check
          %p125 = pneg %p48
        $region22: #{tpu_custom_call.1} parent=19 // pred_check_branch
          %127 = sbr.rel (%p125) target = $region24
        $region23: #{tpu_custom_call.1} parent=19 // pred_region
          %s128 = sand.u32 %s38, 1
          %s129 = scalar_lea.sflag [#allocation3], %s128
          %s130 = sand.u32 %s38, 1
          %s131 = smul.addr %s130, 8
          %s132 = scalar_lea.vmem [#allocation2], %s131
          %s133 = smul.u32 2, %s22
          %s135 = ssub.s32 128, 128
          %136 = vsyncadd %s129, %s135
          %s137 = smul.addr %s21, 2
          %s138 = sadd.s32 %s133, %s137
          %s139 = smul.addr %s138, 64
          %s140 = scalar_lea.hbm %s0, %s139
          %s142 = sshll.u32 %s132, 4
          %s143 = int_to_ptr.vmem [resolvable:$true] %s142
          %145 = dma.hbm_to_vmem [thread:$0]  %s140, 128, %s143, %s129
        $region24: #{tpu_custom_call.1} parent=19 // pred_fallthru
          _
      $region20: #{tpu_custom_call.1} parent=5 // pred_fallthru
        _
      %p146 = scmp.le.s32.totalorder 1, %s14
      %p147 = scmp.lt.s32.totalorder %s14, 3
      %p148 = pnand %p146, %p147
      %p149 = pneg %p148
      // Predicated region
      $region25: #{tpu_custom_call.1} parent=5 // pred_check
        _
      $region26: #{tpu_custom_call.1} parent=5 // pred_check_branch
        %151 = sbr.rel (%p148) target = $region28
      $region27: #{tpu_custom_call.1} parent=5 // pred_region
        %s152 = ssub.s32 %s14, 1
        %s153 = sand.u32 %s41, 1
        %s154 = scalar_lea.sflag [#allocation3], %s153
        %s155 = sand.u32 %s41, 1
        %s156 = smul.addr %s155, 8
        %s157 = scalar_lea.vmem [#allocation2], %s156
        // Predicated region
        $region29: #{tpu_custom_call.1} parent=27 // pred_check
          %p158 = pneg %p54
        $region30: #{tpu_custom_call.1} parent=27 // pred_check_branch
          %160 = sbr.rel (%p158) target = $region32
        $region31: #{tpu_custom_call.1} parent=27 // pred_region
          %161 = dma.done %s154, 128
        $region32: #{tpu_custom_call.1} parent=27 // pred_fallthru
          _
        %s162 = sand.u32 %s41, 1
        %s163 = scalar_lea.sflag [#allocation3], %s162
        %s164 = sand.u32 %s41, 1
        %s165 = smul.addr %s164, 8
        %s166 = scalar_lea.vmem [#allocation2], %s165
        %p167 = pneg %p54
        %p168 = pneg %p51
        %p169 = pneg %p75
        %p170 = pneg %p72
        %p171 = pneg %p103
        %p172 = pneg %p100
        %s173 = sand.u32 %s90, 1
        %s174 = scalar_lea.sflag [#allocation4], %s173
        %s175 = sand.u32 %s90, 1
        %s176 = smul.addr %s175, 2
        %s177 = scalar_lea.vmem [#allocation5], %s176
        %s178 = smul.u32 2, %s24
        %s179 = smul.u32 2, %s24
        %v180 = vld [vmem:[%s157] sm:$0xff]
        %v181 = vld [vmem:[%s1] sm:$0xf]
        %183 = vset.pattern.permute.xlu0 0
        %184 = vperm.xlu0 %183, %v181
        %v185 = vpop.permute.xlu0 %184
        %v187 = vunpack.c.l.s4 839922192
        %v188 = vunpack.c.0.s8 %v187
        %v189 = vlaneseq
        %v190 = vshrl.u32 %v189, 7
        %v191 = vsub.s32 %v188, %v190
        %v192 = vrot.slane %v185, %v191
        %v194 = vmul.f32 %v180, %v192
        %v196 = vcombine.high %v194, %v194
        %vm198 = vcmask 1043456
        %v199 = vsel %vm198, %v194, 0.0
        %v200 = vrot.slane %v199, 4
        %v201 = vadd.f32 %v199, %v200
        %v202 = vrot.slane %v201, 2
        %v203 = vadd.f32 %v201, %v202
        %v204 = vrot.slane %v203, 1
        %v205 = vadd.f32 %v203, %v204
        %v206 = vsel %vm198, %v196, 0.0
        %v207 = vrot.slane %v206, 4
        %v208 = vadd.f32 %v206, %v207
        %v209 = vrot.slane %v208, 2
        %v210 = vadd.f32 %v208, %v209
        %v211 = vrot.slane %v210, 1
        %v212 = vadd.f32 %v210, %v211
        %v215 = vcombine.low %v205, %v212
        %v217 = vunpack.c.l.s4 1966171168
        %v218 = vunpack.c.0.s8 %v217
        %v219 = vlaneseq
        %v220 = vshrl.u32 %v219, 7
        %v221 = vsub.s32 %v218, %v220
        %v222 = vrot.slane %v215, %v221
        %v224 = vunpack.c.l.s4 1966171168
        %v225 = vunpack.c.0.s8 %v224
        %v226 = vlaneseq
        %v227 = vshrl.u32 %v226, 7
        %v228 = vsub.s32 %v225, %v227
        %v229 = vrot.slane %v222, %v228
        %v231 = vlaneseq
        %vm232 = vcmp.ge.s32.totalorder %v231, 0
        %vm233 = vcmp.lt.s32.totalorder %v231, 256
        %vm234 = vmand %vm232, %vm233
        %235 = vst.msk [vmem:[%s177] sm:$0x3] %vm234, %v229
        %s236 = sand.u32 %s90, 1
        %s237 = scalar_lea.sflag [#allocation4], %s236
        %s238 = sand.u32 %s90, 1
        %s239 = smul.addr %s238, 2
        %s240 = scalar_lea.vmem [#allocation5], %s239
        // Predicated region
        $region33: #{tpu_custom_call.1} parent=27 // pred_check
          %p241 = pneg %p100
        $region34: #{tpu_custom_call.1} parent=27 // pred_check_branch
          %243 = sbr.rel (%p241) target = $region36
        $region35: #{tpu_custom_call.1} parent=27 // pred_region
          %s244 = smul.u32 2, %s24
          %s246 = ssub.s32 32, 32
          %247 = vsyncadd %s237, %s246
          %s248 = smul.addr %s23, 2
          %s249 = sadd.s32 %s244, %s248
          %s250 = smul.addr %s249, 16
          %s251 = scalar_lea.hbm %s2, %s250
          %s253 = sshll.u32 %s240, 4
          %s254 = int_to_ptr.vmem [resolvable:$true] %s253
          %256 = dma.vmem_to_hbm [thread:$0]  %s254, 32, %s251, %s237
        $region36: #{tpu_custom_call.1} parent=27 // pred_fallthru
          _
      $region28: #{tpu_custom_call.1} parent=5 // pred_fallthru
        _
      %p257 = scmp.le.s32.totalorder 2, %s14
      // Predicated region
      $region37: #{tpu_custom_call.1} parent=5 // pred_check
        %p258 = pneg %p257
      $region38: #{tpu_custom_call.1} parent=5 // pred_check_branch
        %260 = sbr.rel (%p258) target = $region40
      $region39: #{tpu_custom_call.1} parent=5 // pred_region
        %s261 = ssub.s32 %s14, 2
        // Predicated region
        $region41: #{tpu_custom_call.1} parent=39 // pred_check
          %p262 = pneg %p106
        $region42: #{tpu_custom_call.1} parent=39 // pred_check_branch
          %264 = sbr.rel (%p262) target = $region44
        $region43: #{tpu_custom_call.1} parent=39 // pred_region
          %s265 = sand.u32 %s91, 1
          %s266 = scalar_lea.sflag [#allocation4], %s265
          %s267 = sand.u32 %s91, 1
          %s268 = smul.addr %s267, 2
          %s269 = scalar_lea.vmem [#allocation5], %s268
          %270 = dma.done %s266, 32
        $region44: #{tpu_custom_call.1} parent=39 // pred_fallthru
          _
      $region40: #{tpu_custom_call.1} parent=5 // pred_fallthru
        _
    $region6: #{tpu_custom_call.1} parent=1 // loop_footer
      %s18 = sadd.s32 1, %s14
    $region7: #{tpu_custom_call.1} parent=1 // loop_footer_branch
      %13 = sbr.rel target = $region3
    $region8: #{tpu_custom_call.1} parent=1 // loop_exit
      _
    %271 = vsyncpa [#allocation3], 1
    %s272 = scalar_lea.sflag [#allocation3], 1
    %273 = vsyncpa %s272, 1
    %274 = vsyncpa [#allocation4], 1
    %s275 = scalar_lea.sflag [#allocation4], 1
    %276 = vsyncpa %s275, 1

</llo_original>
